<compile_context>
chip_gen: v5e
topology: v5e:2x2
jax: 0.10.0
libtpu: 0.0.40
codegen_flags: <defaults>
</compile_context>

<pallas_src>
import functools

import jax
import jax.numpy as jnp
from jax.experimental import pallas as pl
from jax.experimental.pallas import tpu as pltpu


def mlp_kernel(x_ref, wh_ref, bh_ref, wo_ref, bo_ref, o_ref, *,
               n_hidden, n_actions, softmax):
    """One batch block through the whole MLP. Every ref is lane-dense (last dim 128k)."""
    h = x_ref[...]                                                    # (TB, P) f32
    # Hidden layers: tanh(h @ W_l + b_l). Zero-padded weight rows/cols keep the padded
    # feature lanes at exactly 0 through every layer (tanh(0) == 0). Small fixed depth
    # -> keep the Python loop unrolled (LLO visibility); for very deep nets switch to
    # lax.fori_loop over wh_ref[l].
    for l in range(n_hidden):
        z = jnp.dot(h.astype(jnp.bfloat16), wh_ref[l],
                    preferred_element_type=jnp.float32) + bh_ref[l]
        h = jnp.tanh(z)
    logits = jnp.dot(h.astype(jnp.bfloat16), wo_ref[...],
                     preferred_element_type=jnp.float32) + bo_ref[...]  # (TB, P_out)
    if softmax:
        # Per-sample masked softmax over the valid action lanes; padded lanes -> prob 0
        # (exp(-1e30 - m) underflows to exactly 0 in f32, no second where needed).
        lane = jax.lax.broadcasted_iota(jnp.int32, logits.shape, 1)
        masked = jnp.where(lane < n_actions, logits, -1e30)
        m = jnp.max(masked, axis=-1, keepdims=True)
        e = jnp.exp(masked - m)
        logits = e * pl.reciprocal(jnp.sum(e, axis=-1, keepdims=True), approx=True)
    o_ref[...] = logits


def _resident_spec(shape):
    """Grid-invariant operand: DMA'd once, single VMEM copy (no ping-pong buffer)."""
    n = len(shape)
    return pl.BlockSpec(shape, lambda i: (0,) * n, pipeline_mode=pl.Buffered(1))


def init_params(key, isize, hsizes, nbactions):
    """PyTorch-nn.Linear-shaped params: list of (W (out, in), b (out,)) per layer."""
    in_sizes = [isize] + list(hsizes)
    out_sizes = list(hsizes) + [nbactions]
    keys = jax.random.split(key, 2 * len(in_sizes))
    params = []
    for i, (fi, fo) in enumerate(zip(in_sizes, out_sizes)):
        bound = 1.0 / (float(fi) ** 0.5)
        w = jax.random.uniform(keys[2 * i], (fo, fi), jnp.float32, -bound, bound)
        b = jax.random.uniform(keys[2 * i + 1], (fo,), jnp.float32, -bound, bound)
        params.append((w, b))
    return params


def make_regular_network_forward(params, isize, *, softmax):
    """Builds a jitted forward(inputs) for one parameter set.

    All stacking/padding of the PyTorch-layout params happens here, ONCE (hoisted out of
    the per-call path per the review); the returned callable only pads the batch and
    runs the Pallas kernel.
    """
    n_layers = len(params)
    n_hidden = n_layers - 1
    n_actions = params[-1][0].shape[0]

    # Shared lane-dense width for input + hidden activations; narrow width for the head.
    feat_widths = [isize] + [w.shape[0] for w, _ in params[:-1]]
    P = 128 * pl.cdiv(max(feat_widths), 128)
    P_out = 128 * pl.cdiv(n_actions, 128)

    # Stack hidden-layer weights (transposed to (in, out)) and biases. Zero padding
    # keeps padded lanes exactly 0 through tanh; weights go to bf16 (MXU inputs only),
    # biases stay f32 (added to the f32 accumulator).
    lh = max(n_hidden, 1)                 # dummy block if there are no hidden layers
    w_hid = jnp.zeros((lh, P, P), jnp.float32)
    b_hid = jnp.zeros((lh, 1, P), jnp.float32)
    for l, (w, b) in enumerate(params[:-1]):
        fo, fi = w.shape
        w_hid = w_hid.at[l, :fi, :fo].set(w.T)
        b_hid = b_hid.at[l, 0, :fo].set(b)
    w_hid = w_hid.astype(jnp.bfloat16)

    wo, bo = params[-1]
    fo, fi = wo.shape
    w_out = (jnp.zeros((P, P_out), jnp.float32).at[:fi, :fo].set(wo.T)
             .astype(jnp.bfloat16))
    b_out = jnp.zeros((1, P_out), jnp.float32).at[0, :fo].set(bo)

    @jax.jit
    def forward(inputs):
        B = inputs.shape[0]
        # Batch block: multiple of 8, capped at 256 (fills the 256-wide v6e/v7x MXU; the
        # 128-wide v5e MXU just takes two passes). When the whole batch fits in one
        # block but is big enough, split it in two so the "parallel" grid axis can be
        # sharded across the two v7x TensorCores.
        TB = min(256, 8 * pl.cdiv(B, 8))
        if pl.cdiv(B, TB) < 2 <= TB // 8:
            TB = 8 * pl.cdiv(pl.cdiv(B, 2), 8)
        B_pad = TB * pl.cdiv(B, TB)
        x_pad = jnp.zeros((B_pad, P), jnp.float32).at[:B, :isize].set(inputs)

        kernel = functools.partial(
            mlp_kernel, n_hidden=n_hidden, n_actions=n_actions, softmax=softmax)

        # Explicit VMEM budget: single-buffered resident weights + double-buffered
        # in/out batch blocks, with headroom (keeps working once P/TB grow past toys).
        resident = w_hid.size * 2 + w_out.size * 2 + b_hid.size * 4 + b_out.size * 4
        streamed = 2 * TB * (P + P_out) * 4
        vmem_limit = int(min(max(2 * (resident + streamed), 16 * 2**20), 60 * 2**20))

        out = pl.pallas_call(
            kernel,
            out_shape=jax.ShapeDtypeStruct((B_pad, P_out), jnp.float32),
            grid_spec=pltpu.PrefetchScalarGridSpec(
                num_scalar_prefetch=0,
                grid=(B_pad // TB,),
                in_specs=[
                    pl.BlockSpec((TB, P), lambda i: (i, 0)),  # batch-blocked input
                    _resident_spec((lh, P, P)),               # hidden weights (bf16)
                    _resident_spec((lh, 1, P)),               # hidden biases  (f32)
                    _resident_spec((P, P_out)),               # head weight    (bf16)
                    _resident_spec((1, P_out)),               # head bias      (f32)
                ],
                out_specs=pl.BlockSpec((TB, P_out), lambda i: (i, 0)),  # lane-dense
            ),
            compiler_params=pltpu.CompilerParams(
                dimension_semantics=("parallel",),
                vmem_limit_bytes=vmem_limit),
        )(x_pad, w_hid, b_hid, w_out, b_out)

        return out[:B, :n_actions]

    return forward


def reference_forward(params, inputs, *, softmax):
    """Pure-f32 JAX reference mirroring the PyTorch forward."""
    h = inputs
    for w, b in params[:-1]:
        h = jnp.tanh(h @ w.T + b)
    w, b = params[-1]
    out = h @ w.T + b
    if softmax:
        out = jax.nn.softmax(out, axis=-1)
    return out


def reference_forward_mixed(params, inputs, *, softmax):
    """Reference with the kernel's mixed precision (bf16 dot inputs, f32 accumulate)."""
    def mm(h, w):
        return jnp.dot(h.astype(jnp.bfloat16), w.T.astype(jnp.bfloat16),
                       preferred_element_type=jnp.float32)
    h = inputs
    for w, b in params[:-1]:
        h = jnp.tanh(mm(h, w) + b)
    w, b = params[-1]
    out = mm(h, w) + b
    if softmax:
        out = jax.nn.softmax(out, axis=-1)
    return out


if __name__ == "__main__":
    # Pole-balance-like shapes: 4-d state, two hidden layers of 32, 2 actions, batch 8.
    B, ISIZE, HSIZES, NBACTIONS = 8, 4, (32, 32), 2
    key = jax.random.PRNGKey(0)
    k_par, k_x = jax.random.split(key)

    params = init_params(k_par, ISIZE, HSIZES, NBACTIONS)
    inputs = jax.random.normal(k_x, (B, ISIZE), jnp.float32)

    for sf in (True, False):   # sf=True -> softmax action distribution; False -> logits
        fwd = make_regular_network_forward(params, ISIZE, softmax=sf)
        out = jax.block_until_ready(fwd(inputs))
        assert out.shape == (B, NBACTIONS)

        ref_mixed = reference_forward_mixed(params, inputs, softmax=sf)
        ref_f32 = reference_forward(params, inputs, softmax=sf)
        tol = 1e-2 if sf else 1e-4   # approx-EUP reciprocal in the softmax denominator
        assert jnp.allclose(out, ref_mixed, atol=tol, rtol=tol), (sf, out, ref_mixed)
        assert jnp.allclose(out, ref_f32, atol=2e-2, rtol=2e-2), (sf, out, ref_f32)

    # TODO(synk): optimizer/training plumbing (Adam, lr_scheduler) is not part of the
    # forward pass and is intentionally not translated.
    print("KERNEL_OK")
</pallas_src>

<mosaic_0001>
module attributes {stable_mosaic.version = 11 : i64} {
  func.func @mlp_kernel(%arg0: i32, %arg1: memref<8x128xf32, #tpu.memory_space<vmem>>, %arg2: memref<2x128x128xbf16, #tpu.memory_space<vmem>>, %arg3: memref<2x1x128xf32, #tpu.memory_space<vmem>>, %arg4: memref<128x128xbf16, #tpu.memory_space<vmem>>, %arg5: memref<1x128xf32, #tpu.memory_space<vmem>>, %arg6: memref<8x128xf32, #tpu.memory_space<vmem>>) attributes {dimension_semantics = [#tpu.dimension_semantics<parallel>], iteration_bounds = array<i64: 1>, scalar_prefetch = 0 : i64, scratch_operands = 0 : i64, tpu.core_type = #tpu.core_type<tc>, window_params = [{transform_indices = @transform_0, window_bounds = array<i64: 8, 128>}, {pipeline_mode = #tpu.pipeline_mode<synchronous>, transform_indices = @transform_1, window_bounds = array<i64: 2, 128, 128>}, {pipeline_mode = #tpu.pipeline_mode<synchronous>, transform_indices = @transform_2, window_bounds = array<i64: 2, 1, 128>}, {pipeline_mode = #tpu.pipeline_mode<synchronous>, transform_indices = @transform_3, window_bounds = array<i64: 128, 128>}, {pipeline_mode = #tpu.pipeline_mode<synchronous>, transform_indices = @transform_4, window_bounds = array<i64: 1, 128>}, {transform_indices = @transform_5, window_bounds = array<i64: 8, 128>}]} {
    %c0 = arith.constant 0 : index
    %c0_0 = arith.constant 0 : index
    %0 = vector.load %arg1[%c0, %c0_0] : memref<8x128xf32, #tpu.memory_space<vmem>>, vector<8x128xf32>
    %1 = arith.truncf %0 : vector<8x128xf32> to vector<8x128xbf16>
    %c0_1 = arith.constant 0 : index
    %c0_2 = arith.constant 0 : index
    %c0_3 = arith.constant 0 : index
    %2 = vector.load %arg2[%c0_1, %c0_2, %c0_3] : memref<2x128x128xbf16, #tpu.memory_space<vmem>>, vector<1x128x128xbf16>
    %3 = vector.shape_cast %2 : vector<1x128x128xbf16> to vector<128x128xbf16>
    %cst = arith.constant dense<0.000000e+00> : vector<8x128xf32>
    %4 = tpu.matmul %1, %3, %cst {dimension_numbers = #tpu.dot_dimension_numbers<[1], [0], [0], [1], [0, 0, 1, 1], [], []>} : vector<8x128xbf16>, vector<128x128xbf16>, vector<8x128xf32> -> vector<8x128xf32>
    %c0_4 = arith.constant 0 : index
    %c0_5 = arith.constant 0 : index
    %c0_6 = arith.constant 0 : index
    %5 = vector.load %arg3[%c0_4, %c0_5, %c0_6] : memref<2x1x128xf32, #tpu.memory_space<vmem>>, vector<1x1x128xf32>
    %6 = vector.shape_cast %5 : vector<1x1x128xf32> to vector<1x128xf32>
    %7 = vector.broadcast %6 : vector<1x128xf32> to vector<8x128xf32>
    %8 = arith.addf %4, %7 : vector<8x128xf32>
    %9 = math.tanh %8 : vector<8x128xf32>
    %10 = arith.truncf %9 : vector<8x128xf32> to vector<8x128xbf16>
    %c1 = arith.constant 1 : index
    %c0_7 = arith.constant 0 : index
    %c0_8 = arith.constant 0 : index
    %11 = vector.load %arg2[%c1, %c0_7, %c0_8] : memref<2x128x128xbf16, #tpu.memory_space<vmem>>, vector<1x128x128xbf16>
    %12 = vector.shape_cast %11 : vector<1x128x128xbf16> to vector<128x128xbf16>
    %cst_9 = arith.constant dense<0.000000e+00> : vector<8x128xf32>
    %13 = tpu.matmul %10, %12, %cst_9 {dimension_numbers = #tpu.dot_dimension_numbers<[1], [0], [0], [1], [0, 0, 1, 1], [], []>} : vector<8x128xbf16>, vector<128x128xbf16>, vector<8x128xf32> -> vector<8x128xf32>
    %c1_10 = arith.constant 1 : index
    %c0_11 = arith.constant 0 : index
    %c0_12 = arith.constant 0 : index
    %14 = vector.load %arg3[%c1_10, %c0_11, %c0_12] : memref<2x1x128xf32, #tpu.memory_space<vmem>>, vector<1x1x128xf32>
    %15 = vector.shape_cast %14 : vector<1x1x128xf32> to vector<1x128xf32>
    %16 = vector.broadcast %15 : vector<1x128xf32> to vector<8x128xf32>
    %17 = arith.addf %13, %16 : vector<8x128xf32>
    %18 = math.tanh %17 : vector<8x128xf32>
    %19 = arith.truncf %18 : vector<8x128xf32> to vector<8x128xbf16>
    %c0_13 = arith.constant 0 : index
    %c0_14 = arith.constant 0 : index
    %20 = vector.load %arg4[%c0_13, %c0_14] : memref<128x128xbf16, #tpu.memory_space<vmem>>, vector<128x128xbf16>
    %cst_15 = arith.constant dense<0.000000e+00> : vector<8x128xf32>
    %21 = tpu.matmul %19, %20, %cst_15 {dimension_numbers = #tpu.dot_dimension_numbers<[1], [0], [0], [1], [0, 0, 1, 1], [], []>} : vector<8x128xbf16>, vector<128x128xbf16>, vector<8x128xf32> -> vector<8x128xf32>
    %c0_16 = arith.constant 0 : index
    %c0_17 = arith.constant 0 : index
    %22 = vector.load %arg5[%c0_16, %c0_17] : memref<1x128xf32, #tpu.memory_space<vmem>>, vector<1x128xf32>
    %23 = vector.broadcast %22 : vector<1x128xf32> to vector<8x128xf32>
    %24 = arith.addf %21, %23 : vector<8x128xf32>
    %25 = tpu.iota {dimensions = array<i32: 1>} : vector<8x128xi32>
    %c2_i32 = arith.constant 2 : i32
    %26 = vector.broadcast %c2_i32 : i32 to vector<8x128xi32>
    %27 = arith.cmpi slt, %25, %26 : vector<8x128xi32>
    %cst_18 = arith.constant -1.000000e+30 : f32
    %28 = vector.broadcast %cst_18 : f32 to vector<8x128xf32>
    %29 = arith.select %27, %24, %28 : vector<8x128xi1>, vector<8x128xf32>
    %cst_19 = arith.constant dense<0xFF800000> : vector<8xf32>
    %30 = vector.multi_reduction <maximumf>, %29, %cst_19 [1] : vector<8x128xf32> to vector<8xf32>
    %31 = vector.shape_cast %30 : vector<8xf32> to vector<8x1xf32>
    %32 = vector.broadcast %31 : vector<8x1xf32> to vector<8x128xf32>
    %33 = arith.subf %29, %32 : vector<8x128xf32>
    %34 = math.exp %33 : vector<8x128xf32>
    %cst_20 = arith.constant dense<0.000000e+00> : vector<8xf32>
    %35 = vector.multi_reduction <add>, %34, %cst_20 [1] : vector<8x128xf32> to vector<8xf32>
    %36 = vector.shape_cast %35 : vector<8xf32> to vector<8x1xf32>
    %37 = tpu.reciprocal %36 {approx = true} : vector<8x1xf32> -> vector<8x1xf32>
    %38 = vector.broadcast %37 : vector<8x1xf32> to vector<8x128xf32>
    %39 = arith.mulf %34, %38 : vector<8x128xf32>
    %c0_21 = arith.constant 0 : index
    %c0_22 = arith.constant 0 : index
    %40 = vector.load %arg6[%c0_21, %c0_22] : memref<8x128xf32, #tpu.memory_space<vmem>>, vector<8x128xf32>
    tpu.vector_store %arg6[%c0_21, %c0_22], %39 {strides = array<i32>} : memref<8x128xf32, #tpu.memory_space<vmem>>, vector<8x128xf32>,
    return
  }
  func.func @transform_0(%arg0: i32) -> (i32, i32) {
    %c0_i32 = arith.constant 0 : i32
    %c0_i32_0 = arith.constant 0 : i32
    return %arg0, %c0_i32 : i32, i32
  }
  func.func @transform_1(%arg0: i32) -> (i32, i32, i32) {
    %c0_i32 = arith.constant 0 : i32
    %c0_i32_0 = arith.constant 0 : i32
    %c0_i32_1 = arith.constant 0 : i32
    %c0_i32_2 = arith.constant 0 : i32
    return %c0_i32, %c0_i32_0, %c0_i32_1 : i32, i32, i32
  }
  func.func @transform_2(%arg0: i32) -> (i32, i32, i32) {
    %c0_i32 = arith.constant 0 : i32
    %c0_i32_0 = arith.constant 0 : i32
    %c0_i32_1 = arith.constant 0 : i32
    %c0_i32_2 = arith.constant 0 : i32
    return %c0_i32, %c0_i32_0, %c0_i32_1 : i32, i32, i32
  }
  func.func @transform_3(%arg0: i32) -> (i32, i32) {
    %c0_i32 = arith.constant 0 : i32
    %c0_i32_0 = arith.constant 0 : i32
    %c0_i32_1 = arith.constant 0 : i32
    return %c0_i32, %c0_i32_0 : i32, i32
  }
  func.func @transform_4(%arg0: i32) -> (i32, i32) {
    %c0_i32 = arith.constant 0 : i32
    %c0_i32_0 = arith.constant 0 : i32
    %c0_i32_1 = arith.constant 0 : i32
    return %c0_i32, %c0_i32_0 : i32, i32
  }
  func.func @transform_5(%arg0: i32) -> (i32, i32) {
    %c0_i32 = arith.constant 0 : i32
    %c0_i32_0 = arith.constant 0 : i32
    return %arg0, %c0_i32 : i32, i32
  }
}

</mosaic_0001>

<llo_original>
// kernel: forward.1
$region0: #{forward.1}
  #allocation0 [shape = 'u32[]', space=smem, size = 0x4, offset = 0x4, fixed_abs, tag = 'smem constant byte address 0x4 - core index']
  #allocation1 [shape = 'u32[72,128]{1,0:T(1,128)}', space=vmem, size = 0x9000, scoped, tag = 'internal scratch']
  %s0 = inlined_call_operand.vmem [shape: f32[8,128], index: 0, kind: input, shape index: {}]
  %s1 = inlined_call_operand.hbm [shape: bf16[2,128,128], index: 1, kind: input, shape index: {}]
  %s2 = inlined_call_operand.vmem [shape: f32[2,1,128], index: 2, kind: input, shape index: {}]
  %s3 = inlined_call_operand.hbm [shape: bf16[128,128], index: 3, kind: input, shape index: {}]
  %s4 = inlined_call_operand.vmem [shape: f32[1,128], index: 4, kind: input, shape index: {}]
  %s5 = inlined_call_operand.vmem [shape: f32[8,128], index: 5, kind: output, shape index: {}]
  %s6 = sld [smem:[#allocation0]]
  $region38: #{forward.1} parent=0
    _
  %s8 = ssub.s32 1, %s6
  %s9 = scalar_select 0, %s8, %s6
  $region1: #{forward.1} parent=0
    #allocation2 [shape = 'u8[65536]{0}', space=vmem, size = 0x10000, scoped, tag = 'input window, operand 1, single buffered']
    #allocation3 [shape = 's32[1]{0}', space=sflag, size = 0x4, scoped, tag = 'scoped memory for forward.1']
    #allocation4 [shape = 'u8[32768]{0}', space=vmem, size = 0x8000, scoped, tag = 'input window, operand 3, single buffered']
    #allocation5 [shape = 's32[1]{0}', space=sflag, size = 0x4, scoped, tag = 'scoped memory for forward.1']
    %10 = vsyncpa [#allocation3], 0
    %11 = vsyncpa [#allocation5], 0
    // Predicated region
    $region2: #{forward.1} parent=1 // pred_check
      _
    $region3: #{forward.1} parent=1 // pred_check_branch
      %13 = sbr.rel (0) target = $region5
    $region4: #{forward.1} parent=1 // pred_region
      _
    $region5: #{forward.1} parent=1 // pred_fallthru
      _
    // Predicated region
    $region6: #{forward.1} parent=1 // pred_check
      _
    $region7: #{forward.1} parent=1 // pred_check_branch
      %15 = sbr.rel (0) target = $region9
    $region8: #{forward.1} parent=1 // pred_region
      %17 = vsyncadd [#allocation3], 0
      %s18 = sshll.u32 %s1, 4
      %s19 = int_to_ptr.hbm [resolvable:$true] %s18
      %s20 = sshll.u32 [#allocation2], 4
      %s21 = int_to_ptr.vmem [resolvable:$true] %s20
      %26 = dma.hbm_to_vmem [thread:$0]  %s19, 2048, %s21, [#allocation3], 64, 64, 4
    $region9: #{forward.1} parent=1 // pred_fallthru
      _
    // Predicated region
    $region10: #{forward.1} parent=1 // pred_check
      _
    $region11: #{forward.1} parent=1 // pred_check_branch
      %28 = sbr.rel (0) target = $region13
    $region12: #{forward.1} parent=1 // pred_region
      _
    $region13: #{forward.1} parent=1 // pred_fallthru
      _
    // Predicated region
    $region14: #{forward.1} parent=1 // pred_check
      _
    $region15: #{forward.1} parent=1 // pred_check_branch
      %30 = sbr.rel (0) target = $region17
    $region16: #{forward.1} parent=1 // pred_region
      %32 = vsyncadd [#allocation5], 0
      %s33 = sshll.u32 %s3, 4
      %s34 = int_to_ptr.hbm [resolvable:$true] %s33
      %s35 = sshll.u32 [#allocation4], 4
      %s36 = int_to_ptr.vmem [resolvable:$true] %s35
      %41 = dma.hbm_to_vmem [thread:$0]  %s34, 1024, %s36, [#allocation5], 64, 64, 4
    $region17: #{forward.1} parent=1 // pred_fallthru
      _
    // Predicated region
    $region18: #{forward.1} parent=1 // pred_check
      _
    $region19: #{forward.1} parent=1 // pred_check_branch
      %43 = sbr.rel (0) target = $region21
    $region20: #{forward.1} parent=1 // pred_region
      _
    $region21: #{forward.1} parent=1 // pred_fallthru
      _
    // Predicated region
    $region22: #{forward.1} parent=1 // pred_check
      _
    $region23: #{forward.1} parent=1 // pred_check_branch
      %45 = sbr.rel (0) target = $region25
    $region24: #{forward.1} parent=1 // pred_region
      %47 = dma.done [#allocation3], 2048
    $region25: #{forward.1} parent=1 // pred_fallthru
      _
    // Predicated region
    $region26: #{forward.1} parent=1 // pred_check
      _
    $region27: #{forward.1} parent=1 // pred_check_branch
      %49 = sbr.rel (0) target = $region29
    $region28: #{forward.1} parent=1 // pred_region
      %51 = dma.done [#allocation5], 1024
    $region29: #{forward.1} parent=1 // pred_fallthru
      _
    %v52 = vld [vmem:[%s0] sm:$0xff]
    %v53 = vpack.c.bf16 %v52, %v52
    %v54 = vld [vmem:[#allocation2] sm:$0xf]
    %v55 = vld [vmem:[#allocation2 + $0x4] sm:$0xf]
    %v56 = vld [vmem:[#allocation2 + $0x8] sm:$0xf]
    %v57 = vld [vmem:[#allocation2 + $0xc] sm:$0xf]
    %v58 = vld [vmem:[#allocation2 + $0x10] sm:$0xf]
    %v59 = vld [vmem:[#allocation2 + $0x14] sm:$0xf]
    %v60 = vld [vmem:[#allocation2 + $0x18] sm:$0xf]
    %v61 = vld [vmem:[#allocation2 + $0x1c] sm:$0xf]
    %v62 = vld [vmem:[#allocation2 + $0x20] sm:$0xf]
    %v63 = vld [vmem:[#allocation2 + $0x24] sm:$0xf]
    %v64 = vld [vmem:[#allocation2 + $0x28] sm:$0xf]
    %v65 = vld [vmem:[#allocation2 + $0x2c] sm:$0xf]
    %v66 = vld [vmem:[#allocation2 + $0x30] sm:$0xf]
    %v67 = vld [vmem:[#allocation2 + $0x34] sm:$0xf]
    %v68 = vld [vmem:[#allocation2 + $0x38] sm:$0xf]
    %v69 = vld [vmem:[#allocation2 + $0x3c] sm:$0xf]
    %v70 = vld [vmem:[%s2] sm:$0x1]
    %v72 = vperm.slane %v70, 0
    %v90 = vunpack.c.l.b16 %v54
    %v91 = vunpack.c.l.b16 %v55
    %v92 = vunpack.c.l.b16 %v56
    %v93 = vunpack.c.l.b16 %v57
    %v94 = vunpack.c.l.b16 %v58
    %v95 = vunpack.c.l.b16 %v59
    %v96 = vunpack.c.l.b16 %v60
    %v97 = vunpack.c.l.b16 %v61
    %v98 = vunpack.c.l.b16 %v62
    %v99 = vunpack.c.l.b16 %v63
    %v100 = vunpack.c.l.b16 %v64
    %v101 = vunpack.c.l.b16 %v65
    %v102 = vunpack.c.l.b16 %v66
    %v103 = vunpack.c.l.b16 %v67
    %v104 = vunpack.c.l.b16 %v68
    %v105 = vunpack.c.l.b16 %v69
    %v106 = vpack.c.b16 %v91, %v90
    %v107 = vpack.c.b16 %v93, %v92
    %v108 = vpack.c.b16 %v95, %v94
    %v109 = vpack.c.b16 %v97, %v96
    %v110 = vpack.c.b16 %v99, %v98
    %v111 = vpack.c.b16 %v101, %v100
    %v112 = vpack.c.b16 %v103, %v102
    %v113 = vpack.c.b16 %v105, %v104
    %122 = vmatpush.bf16.msra.mxu0 %v113
    %123 = vmatpush.bf16.msra.mxu0 %v112
    %124 = vmatpush.bf16.msra.mxu0 %v111
    %125 = vmatpush.bf16.msra.mxu0 %v110
    %126 = vmatpush.bf16.msra.mxu0 %v109
    %127 = vmatpush.bf16.msra.mxu0 %v108
    %128 = vmatpush.bf16.msra.mxu0 %v107
    %129 = vmatpush.bf16.msra.mxu0 %v106
    %130 = vmatmul.bf16.gmra.mxu0 %v53
    %v131 = vpop.f32.mrf.mxu0
    %v132 = vadd.f32 %v72, %v131
    %v133 = vpop.f32.mrf.mxu0
    %134 = vdwg.mxu0
    %v135 = vtanh.pop %v132
    %v136 = vpack.c.bf16 %v135, %v135
    %s137 = scalar_lea.vmem [#allocation2], 64
    %v138 = vld [vmem:[%s137] sm:$0xf]
    %v139 = vld [vmem:[%s137 + $0x4] sm:$0xf]
    %v140 = vld [vmem:[%s137 + $0x8] sm:$0xf]
    %v141 = vld [vmem:[%s137 + $0xc] sm:$0xf]
    %v142 = vld [vmem:[%s137 + $0x10] sm:$0xf]
    %v143 = vld [vmem:[%s137 + $0x14] sm:$0xf]
    %v144 = vld [vmem:[%s137 + $0x18] sm:$0xf]
    %v145 = vld [vmem:[%s137 + $0x1c] sm:$0xf]
    %v146 = vld [vmem:[%s137 + $0x20] sm:$0xf]
    %v147 = vld [vmem:[%s137 + $0x24] sm:$0xf]
    %v148 = vld [vmem:[%s137 + $0x28] sm:$0xf]
    %v149 = vld [vmem:[%s137 + $0x2c] sm:$0xf]
    %v150 = vld [vmem:[%s137 + $0x30] sm:$0xf]
    %v151 = vld [vmem:[%s137 + $0x34] sm:$0xf]
    %v152 = vld [vmem:[%s137 + $0x38] sm:$0xf]
    %v153 = vld [vmem:[%s137 + $0x3c] sm:$0xf]
    %s154 = scalar_lea.vmem %s2, 1
    %v155 = vld [vmem:[%s154] sm:$0x1]
    %v157 = vperm.slane %v155, 0
    %v175 = vunpack.c.l.b16 %v138
    %v176 = vunpack.c.l.b16 %v139
    %v177 = vunpack.c.l.b16 %v140
    %v178 = vunpack.c.l.b16 %v141
    %v179 = vunpack.c.l.b16 %v142
    %v180 = vunpack.c.l.b16 %v143
    %v181 = vunpack.c.l.b16 %v144
    %v182 = vunpack.c.l.b16 %v145
    %v183 = vunpack.c.l.b16 %v146
    %v184 = vunpack.c.l.b16 %v147
    %v185 = vunpack.c.l.b16 %v148
    %v186 = vunpack.c.l.b16 %v149
    %v187 = vunpack.c.l.b16 %v150
    %v188 = vunpack.c.l.b16 %v151
    %v189 = vunpack.c.l.b16 %v152
    %v190 = vunpack.c.l.b16 %v153
    %v191 = vpack.c.b16 %v176, %v175
    %v192 = vpack.c.b16 %v178, %v177
    %v193 = vpack.c.b16 %v180, %v179
    %v194 = vpack.c.b16 %v182, %v181
    %v195 = vpack.c.b16 %v184, %v183
    %v196 = vpack.c.b16 %v186, %v185
    %v197 = vpack.c.b16 %v188, %v187
    %v198 = vpack.c.b16 %v190, %v189
    %207 = vmatpush.bf16.msra.mxu0 %v198
    %208 = vmatpush.bf16.msra.mxu0 %v197
    %209 = vmatpush.bf16.msra.mxu0 %v196
    %210 = vmatpush.bf16.msra.mxu0 %v195
    %211 = vmatpush.bf16.msra.mxu0 %v194
    %212 = vmatpush.bf16.msra.mxu0 %v193
    %213 = vmatpush.bf16.msra.mxu0 %v192
    %214 = vmatpush.bf16.msra.mxu0 %v191
    %215 = vmatmul.bf16.gmra.mxu0 %v136
    %v216 = vpop.f32.mrf.mxu0
    %v217 = vadd.f32 %v157, %v216
    %v218 = vpop.f32.mrf.mxu0
    %219 = vdwg.mxu0
    %v220 = vtanh.pop %v217
    %v221 = vpack.c.bf16 %v220, %v220
    %v222 = vld [vmem:[#allocation4] sm:$0xf]
    %v223 = vld [vmem:[#allocation4 + $0x4] sm:$0xf]
    %v224 = vld [vmem:[#allocation4 + $0x8] sm:$0xf]
    %v225 = vld [vmem:[#allocation4 + $0xc] sm:$0xf]
    %v226 = vld [vmem:[#allocation4 + $0x10] sm:$0xf]
    %v227 = vld [vmem:[#allocation4 + $0x14] sm:$0xf]
    %v228 = vld [vmem:[#allocation4 + $0x18] sm:$0xf]
    %v229 = vld [vmem:[#allocation4 + $0x1c] sm:$0xf]
    %v230 = vld [vmem:[#allocation4 + $0x20] sm:$0xf]
    %v231 = vld [vmem:[#allocation4 + $0x24] sm:$0xf]
    %v232 = vld [vmem:[#allocation4 + $0x28] sm:$0xf]
    %v233 = vld [vmem:[#allocation4 + $0x2c] sm:$0xf]
    %v234 = vld [vmem:[#allocation4 + $0x30] sm:$0xf]
    %v235 = vld [vmem:[#allocation4 + $0x34] sm:$0xf]
    %v236 = vld [vmem:[#allocation4 + $0x38] sm:$0xf]
    %v237 = vld [vmem:[#allocation4 + $0x3c] sm:$0xf]
    %v238 = vld [vmem:[%s4] sm:$0x1]
    %v240 = vperm.slane %v238, 0
    %v258 = vunpack.c.l.b16 %v222
    %v259 = vunpack.c.l.b16 %v223
    %v260 = vunpack.c.l.b16 %v224
    %v261 = vunpack.c.l.b16 %v225
    %v262 = vunpack.c.l.b16 %v226
    %v263 = vunpack.c.l.b16 %v227
    %v264 = vunpack.c.l.b16 %v228
    %v265 = vunpack.c.l.b16 %v229
    %v266 = vunpack.c.l.b16 %v230
    %v267 = vunpack.c.l.b16 %v231
    %v268 = vunpack.c.l.b16 %v232
    %v269 = vunpack.c.l.b16 %v233
    %v270 = vunpack.c.l.b16 %v234
    %v271 = vunpack.c.l.b16 %v235
    %v272 = vunpack.c.l.b16 %v236
    %v273 = vunpack.c.l.b16 %v237
    %v274 = vpack.c.b16 %v259, %v258
    %v275 = vpack.c.b16 %v261, %v260
    %v276 = vpack.c.b16 %v263, %v262
    %v277 = vpack.c.b16 %v265, %v264
    %v278 = vpack.c.b16 %v267, %v266
    %v279 = vpack.c.b16 %v269, %v268
    %v280 = vpack.c.b16 %v271, %v270
    %v281 = vpack.c.b16 %v273, %v272
    %290 = vmatpush.bf16.msra.mxu0 %v281
    %291 = vmatpush.bf16.msra.mxu0 %v280
    %292 = vmatpush.bf16.msra.mxu0 %v279
    %293 = vmatpush.bf16.msra.mxu0 %v278
    %294 = vmatpush.bf16.msra.mxu0 %v277
    %295 = vmatpush.bf16.msra.mxu0 %v276
    %296 = vmatpush.bf16.msra.mxu0 %v275
    %297 = vmatpush.bf16.msra.mxu0 %v274
    %298 = vmatmul.bf16.gmra.mxu0 %v221
    %v299 = vpop.f32.mrf.mxu0
    %v300 = vadd.f32 %v240, %v299
    %v301 = vpop.f32.mrf.mxu0
    %302 = vdwg.mxu0
    %v303 = vlaneseq
    %v304 = vand.u32 %v303, 127
    %vm305 = vcmp.lt.s32.totalorder %v304, 2
    %v306 = vsel %vm305, %v300, -1e+30
    %307 = vmax.xlane.f32.xlu0 %v306
    %v308 = vpop.xlane.xlu0 %307
    %v309 = vsub.f32 %v306, %v308
    %v310 = vmul.f32 %v309, 1.442695
    %v311 = vpow.pop %v310
    %312 = vadd.xlane.f32.xlu0 %v311
    %v313 = vpop.xlane.xlu0 %312
    %v314 = vrcp.pop %v313
    %v315 = vmul.f32 %v311, %v314
    %316 = vst [vmem:[%s5] sm:$0xff] %v315
    // Predicated region
    $region30: #{forward.1} parent=1 // pred_check
      _
    $region31: #{forward.1} parent=1 // pred_check_branch
      %318 = sbr.rel (0) target = $region33
    $region32: #{forward.1} parent=1 // pred_region
      _
    $region33: #{forward.1} parent=1 // pred_fallthru
      _
    // Predicated region
    $region34: #{forward.1} parent=1 // pred_check
      _
    $region35: #{forward.1} parent=1 // pred_check_branch
      %320 = sbr.rel (0) target = $region37
    $region36: #{forward.1} parent=1 // pred_region
      _
    $region37: #{forward.1} parent=1 // pred_fallthru
      _
    %321 = vsyncpa [#allocation3], 1
    %322 = vsyncpa [#allocation5], 1

</llo_original>
